<compile_context>
chip_gen: v5e
topology: v5e:2x2
jax: 0.10.0
libtpu: 0.0.40
codegen_flags: <defaults>
</compile_context>

<pallas_src>
import jax
import jax.numpy as jnp
from jax.experimental import pallas as pl
from jax.experimental.pallas import tpu as pltpu


# 512x512 f32 tiles: in + out, double-buffered = 4 * 512 * 512 * 4 B = 4 MiB,
# comfortably under every generation's default scoped VMEM (v5e 16 MiB,
# v6e/v7x 32 MiB) while keeping per-step pipeline overhead (~0.35 us) amortized
# over a 1 MiB tile. 512 is a multiple of the packed sublane requirement for
# f32/bf16/int8 alike.
_TILE = 512

# Below this size a pallas_call is pure launch / per-step overhead for a
# 0-FLOP permutation; let XLA handle it (often folded into the consumer layout).
_SMALL_BYTES = 256 * 1024


def _transpose_kernel(x_ref, o_ref):
    # x_ref block: (TL, TC); o_ref block: (TC, TL). Pure XLU tile transpose.
    o_ref[...] = x_ref[...].T


def _pick_tile(dim: int, tile: int = _TILE) -> int:
    # Full extent for small dims (always legal for a BlockSpec); otherwise an
    # (8,128)-aligned square tile. Ragged edge blocks are clipped by the
    # Pallas pipeline (partial stores are masked to the array bounds).
    return dim if dim <= tile else tile


def pallas_transpose_last2(x: jax.Array) -> jax.Array:
    """Transpose the last two dims of a rank-3 array with a Pallas TPU kernel."""
    n, l, c = x.shape
    tl = _pick_tile(l)
    tc = _pick_tile(c)
    itemsize = jnp.dtype(x.dtype).itemsize

    return pl.pallas_call(
        _transpose_kernel,
        out_shape=jax.ShapeDtypeStruct((n, c, l), x.dtype),
        grid_spec=pltpu.PrefetchScalarGridSpec(
            num_scalar_prefetch=0,
            # Grid walks the OUTPUT in row-major block order: for each batch
            # element and output row-block ci, sweep its column-blocks li.
            grid=(n, pl.cdiv(c, tc), pl.cdiv(l, tl)),
            in_specs=[
                pl.BlockSpec(
                    (pl.Squeezed(), tl, tc), lambda i, ci, li: (i, li, ci)
                ),
            ],
            out_specs=pl.BlockSpec(
                (pl.Squeezed(), tc, tl), lambda i, ci, li: (i, ci, li)
            ),
        ),
        compiler_params=pltpu.CompilerParams(
            # Pure streaming permutation: every grid axis is independent, so
            # the whole tiled grid can be sharded across v7x's two TensorCores.
            dimension_semantics=("parallel", "parallel", "parallel"),
            # ~4 MiB of double-buffered tiles + generous headroom; safely under
            # v7x's 64 MiB physical VMEM and v5e/v6e physical capacity.
            vmem_limit_bytes=32 * 1024 * 1024,
        ),
        # 0-FLOP, HBM-bandwidth-bound op: tell XLA's scheduler so surrounding
        # HLO can overlap with the custom call.
        cost_estimate=pl.CostEstimate(
            flops=0,
            transcendentals=0,
            bytes_accessed=2 * n * l * c * itemsize,
        ),
    )(x)


class Transpose:
    """JAX/Pallas port of the PyTorch `Transpose` module.

    Transposes dims 1 and 2 of a (dim0, dim1, dim2) tensor iff the size of the
    second-to-last axis differs from `dim1` (the size expected by the next
    layer). The check is static (shape-level), mirroring the PyTorch module.
    Note: it silently becomes a no-op when L == dim1, inherited from the spec.
    """

    def __init__(self, dim1: int) -> None:
        self.dim1 = dim1

    def __call__(self, input_tensor: jax.Array) -> jax.Array:
        if input_tensor.shape[-2] != self.dim1:
            nbytes = input_tensor.size * jnp.dtype(input_tensor.dtype).itemsize
            if nbytes < _SMALL_BYTES:
                # Tiny tensor: a pallas_call is pure overhead; let XLA fold the
                # permutation into the consumer's layout instead.
                return jnp.swapaxes(input_tensor, 1, 2)
            return pallas_transpose_last2(input_tensor)
        return input_tensor


if __name__ == "__main__":
    # --- 1. Pallas kernel on the small module-consistent shape --------------
    N, L, C = 2, 16, 8
    x = jax.random.normal(jax.random.PRNGKey(0), (N, L, C), dtype=jnp.float32)
    out = jax.block_until_ready(pallas_transpose_last2(x))
    expected = jnp.swapaxes(x, 1, 2)
    assert out.shape == (N, C, L), out.shape
    assert out.dtype == x.dtype
    assert jnp.array_equal(out, expected), "small-shape transpose mismatch"

    # --- 2. Multi-tile grid with a ragged edge (exercises the tiling path) --
    N2, L2, C2 = 2, 640, 384  # grid = (2, 1, 2); last L-tile is partial
    x2 = jax.random.normal(jax.random.PRNGKey(1), (N2, L2, C2), dtype=jnp.float32)
    module_big = Transpose(dim1=C2)  # L2 != C2 -> transpose fires (kernel path)
    out2 = jax.block_until_ready(module_big(x2))
    assert out2.shape == (N2, C2, L2), out2.shape
    assert jnp.array_equal(out2, jnp.swapaxes(x2, 1, 2)), "tiled transpose mismatch"

    # --- 3. Module dispatch paths --------------------------------------------
    module_small = Transpose(dim1=C)
    out3 = jax.block_until_ready(module_small(x))  # tiny -> swapaxes fast path
    assert jnp.array_equal(out3, expected), "small-path mismatch"

    y = jax.random.normal(jax.random.PRNGKey(2), (N, C, L), dtype=jnp.float32)
    out4 = jax.block_until_ready(module_small(y))  # already (N, C, L) -> identity
    assert jnp.array_equal(out4, y), "identity path mismatch"

    print("KERNEL_OK")
</pallas_src>

<mosaic_0001>
module attributes {stable_mosaic.version = 11 : i64} {
  func.func @_transpose_kernel(%arg0: i32, %arg1: i32, %arg2: i32, %arg3: memref<1x16x8xf32, #tpu.memory_space<vmem>>, %arg4: memref<1x8x16xf32, #tpu.memory_space<vmem>>) attributes {dimension_semantics = [#tpu.dimension_semantics<parallel>, #tpu.dimension_semantics<parallel>, #tpu.dimension_semantics<parallel>], iteration_bounds = array<i64: 2, 1, 1>, scalar_prefetch = 0 : i64, scratch_operands = 0 : i64, tpu.core_type = #tpu.core_type<tc>, window_params = [{transform_indices = @transform_0, window_bounds = array<i64: 1, 16, 8>}, {transform_indices = @transform_1, window_bounds = array<i64: 1, 8, 16>}]} {
    %c0 = arith.constant 0 : index
    %c0_0 = arith.constant 0 : index
    %c0_1 = arith.constant 0 : index
    %0 = vector.load %arg3[%c0, %c0_0, %c0_1] : memref<1x16x8xf32, #tpu.memory_space<vmem>>, vector<1x16x8xf32>
    %1 = vector.shape_cast %0 : vector<1x16x8xf32> to vector<16x8xf32>
    %2 = tpu.transpose %1, [1, 0] : vector<16x8xf32> -> vector<8x16xf32>
    %c0_2 = arith.constant 0 : index
    %c0_3 = arith.constant 0 : index
    %c0_4 = arith.constant 0 : index
    %3 = vector.load %arg4[%c0_2, %c0_3, %c0_4] : memref<1x8x16xf32, #tpu.memory_space<vmem>>, vector<1x8x16xf32>
    %4 = vector.shape_cast %3 : vector<1x8x16xf32> to vector<8x16xf32>
    %5 = vector.shape_cast %2 : vector<8x16xf32> to vector<1x8x16xf32>
    tpu.vector_store %arg4[%c0_2, %c0_3, %c0_4], %5 {strides = array<i32>} : memref<1x8x16xf32, #tpu.memory_space<vmem>>, vector<1x8x16xf32>,
    return
  }
  func.func @transform_0(%arg0: i32, %arg1: i32, %arg2: i32) -> (i32, i32, i32) {
    %c0_i32 = arith.constant 0 : i32
    return %arg0, %arg2, %arg1 : i32, i32, i32
  }
  func.func @transform_1(%arg0: i32, %arg1: i32, %arg2: i32) -> (i32, i32, i32) {
    %c0_i32 = arith.constant 0 : i32
    return %arg0, %arg1, %arg2 : i32, i32, i32
  }
}

</mosaic_0001>

<llo_original>
// kernel: tpu_custom_call.1
$region0: #{tpu_custom_call.1}
  #allocation0 [shape = 'u32[]', space=smem, size = 0x4, offset = 0x4, fixed_abs, tag = 'smem constant byte address 0x4 - core index']
  #allocation1 [shape = 'u32[72,128]{1,0:T(1,128)}', space=vmem, size = 0x9000, scoped, tag = 'internal scratch']
  %s0 = inlined_call_operand.vmem [shape: f32[2,16,8], index: 0, kind: input, shape index: {}]
  %s1 = inlined_call_operand.hbm [shape: f32[2,8,16], index: 1, kind: output, shape index: {}]
  %s2 = sld [smem:[#allocation0]]
  $region37: #{tpu_custom_call.1} parent=0
    _
  %s4 = ssub.s32 1, %s2
  %s5 = scalar_select 0, %s4, %s2
  $region1: #{tpu_custom_call.1} parent=0
    #allocation2 [shape = 'u8[8192]{0}', space=vmem, size = 0x2000, scoped, tag = 'output window, operand 0']
    #allocation3 [shape = 's32[2]{0}', space=sflag, size = 0x8, scoped, tag = 'scoped memory for tpu_custom_call.1']
    %6 = vsyncpa [#allocation3], 0
    %s7 = scalar_lea.sflag [#allocation3], 1
    %8 = vsyncpa %s7, 0
    loop: start=0, step=1, limit=4
    $region2: #{tpu_custom_call.1} parent=1 // loop_pre_header
      _
    $region3: #{tpu_custom_call.1} parent=1 // loop_header
      %s10 = sphi 0, %s14
      %p11 = scmp.ge.s32.totalorder %s10, 4
      %s17 = sphi 0, %s36
      %s18 = sphi 0, %s32
      %s19 = sphi 0, %s28
      %s20 = sphi 0, %s17
      %s21 = sphi 0, %s18
      %s22 = sphi 0, %s19
      %s23 = sphi 0, %s20
      %s24 = sphi 0, %s21
      %s25 = sphi 0, %s22
      %s43 = sphi 0, %s45
      %s46 = sphi 0, %s43
      %s47 = sphi 0, %s46
      %s63 = sphi 0, %s47
      %s73 = sphi 0, %s75
      %s76 = sphi 0, %s73
      %s77 = sphi 0, %s76
      %s93 = sphi 0, %s77
    $region4: #{tpu_custom_call.1} parent=1 // loop_header_branch
      %13 = sbr.rel (%p11) target = $region8
    $region5: #{tpu_custom_call.1} parent=1 // loop_body
      %s15 = ssub.s32 %s10, 1
      %s16 = ssub.s32 %s10, 2
      %s26 = sadd.s32 1, %s19
      %p27 = scmp.ge.s32.totalorder %s26, 1
      %s28 = scalar_select %p27, 0, %s26
      %s29 = sadd.s32 1, %s18
      %s30 = scalar_select %p27, %s29, %s18
      %p31 = scmp.ge.s32.totalorder %s30, 1
      %s32 = scalar_select %p31, 0, %s30
      %s33 = sadd.s32 1, %s17
      %s34 = scalar_select %p31, %s33, %s17
      %p35 = scmp.ge.s32.totalorder %s34, 2
      %s36 = scalar_select %p35, 0, %s34
      %s37 = ssub.s32 %s17, %s36
      %s38 = ssub.s32 %s19, %s28
      %s39 = sor.u32 %s37, %s38
      %s40 = ssub.s32 %s18, %s32
      %s41 = sor.u32 %s39, %s40
      %p42 = scmp.eq.s32.totalorder %s41, 0
      %s44 = sadd.s32 %s43, 1
      %s45 = scalar_select %p42, %s43, %s44
      %p48 = pneg %p42
      %p49 = scmp.eq.s32.totalorder %s10, 1
      %p50 = por %p48, %p49
      %p51 = scmp.ne.s32.totalorder %s43, %s46
      %p52 = scmp.eq.s32.totalorder %s10, 0
      %p53 = por %p51, %p52
      %p54 = scmp.ne.s32.totalorder %s43, %s46
      %p55 = scmp.eq.s32.totalorder %s15, 1
      %p56 = por %p54, %p55
      %p57 = scmp.ne.s32.totalorder %s46, %s47
      %p58 = scmp.eq.s32.totalorder %s15, 0
      %p59 = por %p57, %p58
      %p60 = scmp.ne.s32.totalorder %s46, %s47
      %p61 = scmp.eq.s32.totalorder %s16, 1
      %p62 = por %p60, %p61
      %p64 = scmp.ne.s32.totalorder %s47, %s63
      %p65 = scmp.eq.s32.totalorder %s16, 0
      %p66 = por %p64, %p65
      %s67 = ssub.s32 %s17, %s36
      %s68 = ssub.s32 %s18, %s32
      %s69 = sor.u32 %s67, %s68
      %s70 = ssub.s32 %s19, %s28
      %s71 = sor.u32 %s69, %s70
      %p72 = scmp.eq.s32.totalorder %s71, 0
      %s74 = sadd.s32 %s73, 1
      %s75 = scalar_select %p72, %s73, %s74
      %p78 = pneg %p72
      %p79 = scmp.eq.s32.totalorder %s10, 1
      %p80 = por %p78, %p79
      %p81 = scmp.ne.s32.totalorder %s73, %s76
      %p82 = scmp.eq.s32.totalorder %s10, 0
      %p83 = por %p81, %p82
      %p84 = scmp.ne.s32.totalorder %s73, %s76
      %p85 = scmp.eq.s32.totalorder %s15, 1
      %p86 = por %p84, %p85
      %p87 = scmp.ne.s32.totalorder %s76, %s77
      %p88 = scmp.eq.s32.totalorder %s15, 0
      %p89 = por %p87, %p88
      %p90 = scmp.ne.s32.totalorder %s76, %s77
      %p91 = scmp.eq.s32.totalorder %s16, 1
      %p92 = por %p90, %p91
      %p94 = scmp.ne.s32.totalorder %s77, %s93
      %p95 = scmp.eq.s32.totalorder %s16, 0
      %p96 = por %p94, %p95
      %p97 = scmp.le.s32.totalorder 1, %s10
      %p98 = scmp.lt.s32.totalorder %s10, 3
      %p99 = pnand %p97, %p98
      %p100 = pneg %p99
      // Predicated region
      $region9: #{tpu_custom_call.1} parent=5 // pred_check
        _
      $region10: #{tpu_custom_call.1} parent=5 // pred_check_branch
        %102 = sbr.rel (%p99) target = $region12
      $region11: #{tpu_custom_call.1} parent=5 // pred_region
        %s103 = ssub.s32 %s10, 1
      $region12: #{tpu_custom_call.1} parent=5 // pred_fallthru
        _
      %p104 = scmp.lt.s32.totalorder %s10, 2
      // Predicated region
      $region13: #{tpu_custom_call.1} parent=5 // pred_check
        %p105 = pneg %p104
      $region14: #{tpu_custom_call.1} parent=5 // pred_check_branch
        %107 = sbr.rel (%p105) target = $region16
      $region15: #{tpu_custom_call.1} parent=5 // pred_region
        // Predicated region
        $region17: #{tpu_custom_call.1} parent=15 // pred_check
          %p108 = pneg %p53
        $region18: #{tpu_custom_call.1} parent=15 // pred_check_branch
          %110 = sbr.rel (%p108) target = $region20
        $region19: #{tpu_custom_call.1} parent=15 // pred_region
          %s111 = smul.u32 2, %s19
          %p112 = scmp.lt.s32.totalorder %s17, 1
          %s113 = scalar_select %p112, %s17, 1
          %p114 = scmp.lt.s32.totalorder %s111, 1
          %s115 = scalar_select %p114, %s111, 1
          %p116 = scmp.lt.s32.totalorder %s18, 0
          %s117 = scalar_select %p116, %s18, 0
          %s118 = sadd.s32 %s117, %s115
          %s119 = smul.addr %s113, 2
          %s120 = sadd.s32 %s118, %s119
          %s121 = smul.addr %s120, 8
          %s122 = scalar_lea.vmem %s0, %s121
          %s123 = smul.u32 2, %s19
        $region20: #{tpu_custom_call.1} parent=15 // pred_fallthru
          _
      $region16: #{tpu_custom_call.1} parent=5 // pred_fallthru
        _
      %p124 = scmp.le.s32.totalorder 1, %s10
      %p125 = scmp.lt.s32.totalorder %s10, 3
      %p126 = pnand %p124, %p125
      %p127 = pneg %p126
      // Predicated region
      $region21: #{tpu_custom_call.1} parent=5 // pred_check
        _
      $region22: #{tpu_custom_call.1} parent=5 // pred_check_branch
        %129 = sbr.rel (%p126) target = $region24
      $region23: #{tpu_custom_call.1} parent=5 // pred_region
        %s130 = ssub.s32 %s10, 1
        %s131 = smul.u32 2, %s22
        %p132 = scmp.lt.s32.totalorder %s20, 1
        %s133 = scalar_select %p132, %s20, 1
        %p134 = scmp.lt.s32.totalorder %s131, 1
        %s135 = scalar_select %p134, %s131, 1
        %p136 = scmp.lt.s32.totalorder %s21, 0
        %s137 = scalar_select %p136, %s21, 0
        %s138 = sadd.s32 %s137, %s135
        %s139 = smul.addr %s133, 2
        %s140 = sadd.s32 %s138, %s139
        %s141 = smul.addr %s140, 8
        %s142 = scalar_lea.vmem %s0, %s141
        %p143 = pneg %p59
        %p144 = pneg %p56
        %p145 = pneg %p89
        %p146 = pneg %p86
        %s147 = sand.u32 %s76, 1
        %s148 = scalar_lea.sflag [#allocation3], %s147
        %s149 = sand.u32 %s76, 1
        %s150 = smul.addr %s149, 8
        %s151 = scalar_lea.vmem [#allocation2], %s150
        %s152 = smul.u32 2, %s22
        %p153 = scmp.lt.s32.totalorder %s20, 1
        %s154 = scalar_select %p153, %s20, 1
        %p155 = scmp.lt.s32.totalorder %s152, 1
        %s156 = scalar_select %p155, %s152, 1
        %p157 = scmp.lt.s32.totalorder %s21, 0
        %s158 = scalar_select %p157, %s21, 0
        %s159 = sadd.s32 %s158, %s156
        %s160 = smul.addr %s154, 2
        %s161 = sadd.s32 %s159, %s160
        %s162 = smul.addr %s161, 8
        %s163 = scalar_lea.vmem %s0, %s162
        %s164 = smul.u32 2, %s22
        %v165 = vld [vmem:[%s163] sm:$0xff]
        %v166 = vld [vmem:[%s163 + $0x8] sm:$0xff]
        %167 = vxpose.xlu0.b32.start [1/16] %v165, 128
        %168 = vxpose.xlu0.b32.cont [2/16] %v166, 128
        %169 = vxpose.xlu0.b32.cont [3/16] 0.0, 128
        %170 = vxpose.xlu0.b32.cont [4/16] 0.0, 128
        %171 = vxpose.xlu0.b32.cont [5/16] 0.0, 128
        %172 = vxpose.xlu0.b32.cont [6/16] 0.0, 128
        %173 = vxpose.xlu0.b32.cont [7/16] 0.0, 128
        %174 = vxpose.xlu0.b32.cont [8/16] 0.0, 128
        %175 = vxpose.xlu0.b32.cont [9/16] 0.0, 128
        %176 = vxpose.xlu0.b32.cont [10/16] 0.0, 128
        %177 = vxpose.xlu0.b32.cont [11/16] 0.0, 128
        %178 = vxpose.xlu0.b32.cont [12/16] 0.0, 128
        %179 = vxpose.xlu0.b32.cont [13/16] 0.0, 128
        %180 = vxpose.xlu0.b32.cont [14/16] 0.0, 128
        %181 = vxpose.xlu0.b32.cont [15/16] 0.0, 128
        %182 = vxpose.xlu0.b32.end [16/16] 0.0, 128
        %v183 = vpop.trf.xlu0
        %v184 = vpop.trf.xlu0
        %v185 = vpop.trf.xlu0
        %v186 = vpop.trf.xlu0
        %v187 = vpop.trf.xlu0
        %v188 = vpop.trf.xlu0
        %v189 = vpop.trf.xlu0
        %v190 = vpop.trf.xlu0
        %v191 = vpop.trf.xlu0
        %v192 = vpop.trf.xlu0
        %v193 = vpop.trf.xlu0
        %v194 = vpop.trf.xlu0
        %v195 = vpop.trf.xlu0
        %v196 = vpop.trf.xlu0
        %v197 = vpop.trf.xlu0
        %v198 = vpop.trf.xlu0
        %vm199 = vcmask 130048
        %200 = vst.msk [vmem:[%s151] sm:$0xff] %vm199, %v183
        %s201 = sand.u32 %s76, 1
        %s202 = scalar_lea.sflag [#allocation3], %s201
        %s203 = sand.u32 %s76, 1
        %s204 = smul.addr %s203, 8
        %s205 = scalar_lea.vmem [#allocation2], %s204
        // Predicated region
        $region25: #{tpu_custom_call.1} parent=23 // pred_check
          %p206 = pneg %p86
        $region26: #{tpu_custom_call.1} parent=23 // pred_check_branch
          %208 = sbr.rel (%p206) target = $region28
        $region27: #{tpu_custom_call.1} parent=23 // pred_region
          %210 = vsyncadd %s202, 0
          %s211 = sadd.s32 %s22, %s21
          %s212 = sadd.s32 %s211, %s20
          %s213 = smul.addr %s212, 8
          %s214 = scalar_lea.hbm %s1, %s213
          %s216 = sshll.u32 %s205, 4
          %s217 = int_to_ptr.vmem [resolvable:$true] %s216
          %s218 = sshll.u32 %s214, 4
          %s219 = int_to_ptr.hbm [resolvable:$true] %s218
          %221 = dma.vmem_to_hbm [thread:$0]  %s217, 128, %s219, %s202
        $region28: #{tpu_custom_call.1} parent=23 // pred_fallthru
          _
      $region24: #{tpu_custom_call.1} parent=5 // pred_fallthru
        _
      %p222 = scmp.le.s32.totalorder 2, %s10
      // Predicated region
      $region29: #{tpu_custom_call.1} parent=5 // pred_check
        %p223 = pneg %p222
      $region30: #{tpu_custom_call.1} parent=5 // pred_check_branch
        %225 = sbr.rel (%p223) target = $region32
      $region31: #{tpu_custom_call.1} parent=5 // pred_region
        %s226 = ssub.s32 %s10, 2
        // Predicated region
        $region33: #{tpu_custom_call.1} parent=31 // pred_check
          %p227 = pneg %p92
        $region34: #{tpu_custom_call.1} parent=31 // pred_check_branch
          %229 = sbr.rel (%p227) target = $region36
        $region35: #{tpu_custom_call.1} parent=31 // pred_region
          %s230 = sand.u32 %s77, 1
          %s231 = scalar_lea.sflag [#allocation3], %s230
          %s232 = sand.u32 %s77, 1
          %s233 = smul.addr %s232, 8
          %s234 = scalar_lea.vmem [#allocation2], %s233
          %236 = dma.done %s231, 128
        $region36: #{tpu_custom_call.1} parent=31 // pred_fallthru
          _
      $region32: #{tpu_custom_call.1} parent=5 // pred_fallthru
        _
    $region6: #{tpu_custom_call.1} parent=1 // loop_footer
      %s14 = sadd.s32 1, %s10
    $region7: #{tpu_custom_call.1} parent=1 // loop_footer_branch
      %9 = sbr.rel target = $region3
    $region8: #{tpu_custom_call.1} parent=1 // loop_exit
      _
    %237 = vsyncpa [#allocation3], 1
    %s238 = scalar_lea.sflag [#allocation3], 1
    %239 = vsyncpa %s238, 1

</llo_original>
